<compile_context>
chip_gen: v7x
topology: tpu7x:2x2x1
jax: 0.10.0
libtpu: 0.0.40
codegen_flags: <defaults>
</compile_context>

<pallas_src>
import functools

import jax
import jax.numpy as jnp
from jax.experimental import pallas as pl
from jax.experimental.pallas import tpu as pltpu

_LANES = 128
_SUBLANES = 32                      # int8 sublane tiling -> row tiles in 32s
_MAX_TILE_ROWS = 8192               # 8192 x 128 f32 = 4 MiB per input buffer
_MIN_TILE_ROWS = 16 * _SUBLANES     # keep blocks >= 0.25 MiB when splitting
_VMEM_LIMIT_BYTES = 32 * 1024 * 1024


def _round_up(x, m):
    return -(-x // m) * m


def _cdiv(a, b):
    return -(-a // b)


def _focal_pow(x, gamma):
    """x**gamma with small integer gammas as explicit multiplies (no EUP pow)."""
    if gamma == 0.0:
        return jnp.ones_like(x)
    if gamma == 1.0:
        return x
    if gamma == 2.0:
        return x * x
    if gamma == 3.0:
        return x * x * x
    return x ** gamma


def _reduce_and_store(loss, out_ref, last_tile_residual):
    """Lane-dense (1, 128) partial sum; mask the padded/OOB tail only on the last tile."""
    if last_tile_residual is None:
        out_ref[...] = jnp.sum(loss, axis=0, keepdims=True)
        return

    is_last = pl.program_id(0) == pl.num_programs(0) - 1

    @pl.when(jnp.logical_not(is_last))
    def _():
        out_ref[...] = jnp.sum(loss, axis=0, keepdims=True)

    @pl.when(is_last)
    def _():
        tr, lanes = loss.shape
        row = jax.lax.broadcasted_iota(jnp.int32, (tr, lanes), 0)
        lane = jax.lax.broadcasted_iota(jnp.int32, (tr, lanes), 1)
        local_idx = row * lanes + lane                 # tile-local: no overflow
        masked = jnp.where(local_idx < last_tile_residual, loss, 0.0)
        out_ref[...] = jnp.sum(masked, axis=0, keepdims=True)


def _focal_binary_kernel(z_ref, t_ref, out_ref, *, gamma, last_tile_residual):
    """Collapsed binary focal BCE: unit alpha weight, pt picked by t."""
    z = z_ref[...].astype(jnp.float32)
    t = t_ref[...] != 0
    p = jax.nn.sigmoid(z)
    pt = jnp.where(t, p, 1.0 - p)            # matches the torch reference exactly
    focal = _focal_pow(1.0 - pt, gamma)      # alpha + (1 - alpha) == 1 after collapse
    loss = -focal * jnp.maximum(jnp.log(pt), -100.0)
    _reduce_and_store(loss, out_ref, last_tile_residual)


def _focal_negatives_kernel(z_ref, out_ref, *, alpha_neg, gamma, last_tile_residual):
    """All-negative-class focal BCE term over every logit (multiclass path)."""
    z = z_ref[...].astype(jnp.float32)
    p = jax.nn.sigmoid(z)
    # t == 0 everywhere: pt = 1 - p, (1 - pt) = p, weight = (1 - alpha)
    focal = _focal_pow(p, gamma)
    loss = (-alpha_neg) * focal * jnp.maximum(jnp.log(1.0 - p), -100.0)
    _reduce_and_store(loss, out_ref, last_tile_residual)


def _launch(kernel, flat_inputs, n_valid, max_tile_rows):
    """Lane-dense repack + tiled pallas_call returning (num_tiles, 128) partial sums."""
    lane_pad = (-n_valid) % _LANES
    rows = (n_valid + lane_pad) // _LANES

    tiled = []
    for a in flat_inputs:
        if lane_pad:
            a = jnp.pad(a, (0, lane_pad))    # <= 127 elems; skipped entirely when aligned
        tiled.append(a.reshape(rows, _LANES))

    max_tile_rows = max(_SUBLANES, (int(max_tile_rows) // _SUBLANES) * _SUBLANES)
    if rows <= 2 * _SUBLANES:
        tile_rows = rows                     # single full-array block
    else:
        rows32 = (rows // _SUBLANES) * _SUBLANES
        want = _round_up(_cdiv(rows, 4), _SUBLANES)   # aim for >= 4 tiles (2 / v7x TC)
        want = max(want, _MIN_TILE_ROWS)              # but keep blocks reasonably big
        tile_rows = min(want, max_tile_rows, rows32)
    num_tiles = _cdiv(rows, tile_rows)

    # Only the last tile can contain lane-padding or OOB rows; pass its valid
    # element count as a compile-time constant (None -> no mask anywhere).
    residual = n_valid - (num_tiles - 1) * tile_rows * _LANES
    if residual == tile_rows * _LANES:
        residual = None

    kernel = functools.partial(kernel, last_tile_residual=residual)

    in_bytes = sum(int(a.size) * a.dtype.itemsize for a in tiled)
    cost = pl.CostEstimate(
        flops=int(8 * n_valid),
        transcendentals=int(2 * n_valid),           # sigmoid + log per element
        bytes_accessed=int(in_bytes + num_tiles * _LANES * 4),
    )

    return pl.pallas_call(
        kernel,
        out_shape=jax.ShapeDtypeStruct((num_tiles, _LANES), jnp.float32),
        grid=(num_tiles,),
        in_specs=[pl.BlockSpec((tile_rows, _LANES), lambda i: (i, 0))
                  for _ in tiled],
        out_specs=pl.BlockSpec((1, _LANES), lambda i: (i, 0)),
        compiler_params=pltpu.CompilerParams(
            dimension_semantics=("parallel",),
            vmem_limit_bytes=_VMEM_LIMIT_BYTES),
        cost_estimate=cost,
    )(*tiled)


def focal_loss(input_logits, target, alpha=0.25, gamma=1.0,
               max_tile_rows=_MAX_TILE_ROWS):
    """Matches FocalLoss(alpha, gamma)(input, target) forward semantics."""
    x = jnp.asarray(input_logits)
    if x.dtype != jnp.bfloat16 and x.dtype != jnp.float32:
        x = x.astype(jnp.float32)            # bf16 inputs stay bf16 (cast on-chip)
    if x.ndim == 1:
        x = x[:, None]
    n, c = x.shape
    tgt = jnp.asarray(target).astype(jnp.int32).reshape(n)
    alpha = float(alpha)
    gamma = float(gamma)

    if c == 1:
        # Binary: classes [1-p, p] of a sample share pt and their alpha weights
        # sum to 1 -> one element per sample, unit weight, mean divisor 2N.
        z_flat = x.reshape(n)
        t_flat = (tgt == 1).astype(jnp.int8)
        kernel = functools.partial(_focal_binary_kernel, gamma=gamma)
        partials = _launch(kernel, (z_flat, t_flat), n, max_tile_rows)
        correction = 0.0
        denom = 2.0 * float(n)
    else:
        # Multiclass: kernel sums the all-negative-class term over every logit;
        # the N target positions are corrected with a tiny JAX-side gather, so
        # no one-hot tensor is ever materialized or streamed.
        z_flat = x.reshape(n * c)
        kernel = functools.partial(_focal_negatives_kernel,
                                   alpha_neg=1.0 - alpha, gamma=gamma)
        partials = _launch(kernel, (z_flat,), n * c, max_tile_rows)

        zt = jnp.take_along_axis(x, tgt[:, None], axis=1)[:, 0].astype(jnp.float32)
        p_t = jax.nn.sigmoid(zt)
        log_p = jnp.maximum(jnp.log(p_t), -100.0)
        log_1mp = jnp.maximum(jnp.log(1.0 - p_t), -100.0)
        loss_pos = -alpha * _focal_pow(1.0 - p_t, gamma) * log_p
        loss_neg = -(1.0 - alpha) * _focal_pow(p_t, gamma) * log_1mp
        correction = jnp.sum(loss_pos - loss_neg)
        denom = float(n) * float(c)

    # tiny final reduction + mean divide (Python-float constant, full precision)
    return (jnp.sum(partials) + correction) * (1.0 / denom)


def _focal_loss_ref(input_logits, target, alpha=0.25, gamma=1.0):
    """Pure-JAX reference mirroring the PyTorch module."""
    x = jnp.asarray(input_logits, dtype=jnp.float32)
    if x.ndim == 1:
        x = x[:, None]
    p = jax.nn.sigmoid(x)
    if x.shape[1] == 1:
        p = jnp.concatenate([1.0 - p, p], axis=1)
        num_class = 2
    else:
        num_class = x.shape[1]
    t = jnp.eye(num_class, dtype=jnp.float32)[jnp.asarray(target, dtype=jnp.int32)]
    pt = p * t + (1.0 - p) * (1.0 - t)
    w = (alpha * t + (1.0 - alpha) * (1.0 - t)) * (1.0 - pt) ** gamma
    log_p = jnp.maximum(jnp.log(p), -100.0)
    log_1mp = jnp.maximum(jnp.log(1.0 - p), -100.0)
    loss = -w * (t * log_p + (1.0 - t) * log_1mp)
    return jnp.mean(loss)


if __name__ == "__main__":
    key = jax.random.PRNGKey(0)

    # --- BINARY docstring example ---
    bin_target = jnp.array([0, 1, 0, 1], dtype=jnp.int32)
    bin_input = jnp.array([[0.6], [0.7], [0.3], [0.8]], dtype=jnp.float32)
    out_bin = focal_loss(bin_input, bin_target)
    ref_bin = _focal_loss_ref(bin_input, bin_target)

    # --- MULTICLASS docstring example ---
    mc_target = jnp.array([1, 0, 2], dtype=jnp.int32)
    mc_input = jnp.array(
        [[0.2, 0.5, 0.3], [0.8, 0.1, 0.1], [0.7, 0.2, 0.1]], dtype=jnp.float32)
    out_mc = focal_loss(mc_input, mc_target)
    ref_mc = _focal_loss_ref(mc_input, mc_target)

    # --- random multiclass, non-default alpha and gamma == 2 (squared focal) ---
    k1, k2, k3, k4, k5, k6 = jax.random.split(key, 6)
    rnd_input = jax.random.normal(k1, (8, 4), dtype=jnp.float32)
    rnd_target = jax.random.randint(k2, (8,), 0, 4, dtype=jnp.int32)
    out_rnd = focal_loss(rnd_input, rnd_target, alpha=0.4, gamma=2.0)
    ref_rnd = _focal_loss_ref(rnd_input, rnd_target, alpha=0.4, gamma=2.0)

    # --- multi-tile grid + ragged last tile + lane-pad (masked last tile path) ---
    big_input = jax.random.normal(k3, (1200, 7), dtype=jnp.float32)
    big_target = jax.random.randint(k4, (1200,), 0, 7, dtype=jnp.int32)
    out_big = focal_loss(big_input, big_target, max_tile_rows=32)
    ref_big = _focal_loss_ref(big_input, big_target)

    # --- multi-tile grid, fully aligned: zero pad copy, no in-kernel mask ---
    al_input = jax.random.normal(k5, (1024, 16), dtype=jnp.float32)
    al_target = jax.random.randint(k6, (1024,), 0, 16, dtype=jnp.int32)
    out_al = focal_loss(al_input, al_target, max_tile_rows=32)
    ref_al = _focal_loss_ref(al_input, al_target)

    jax.block_until_ready((out_bin, out_mc, out_rnd, out_big, out_al))

    assert jnp.allclose(out_bin, ref_bin, atol=1e-5, rtol=1e-4), (out_bin, ref_bin)
    assert jnp.allclose(out_mc, ref_mc, atol=1e-5, rtol=1e-4), (out_mc, ref_mc)
    assert jnp.allclose(out_rnd, ref_rnd, atol=1e-5, rtol=1e-4), (out_rnd, ref_rnd)
    assert jnp.allclose(out_big, ref_big, atol=1e-5, rtol=1e-4), (out_big, ref_big)
    assert jnp.allclose(out_al, ref_al, atol=1e-5, rtol=1e-4), (out_al, ref_al)

    print("KERNEL_OK")
</pallas_src>

<mosaic_0001>
module attributes {stable_mosaic.version = 11 : i64} {
  func.func @_focal_binary_kernel(%arg0: i32, %arg1: memref<1x128xf32, #tpu.memory_space<vmem>>, %arg2: memref<1x128xi8, #tpu.memory_space<vmem>>, %arg3: memref<1x128xf32, #tpu.memory_space<vmem>>) attributes {dimension_semantics = [#tpu.dimension_semantics<parallel>], iteration_bounds = array<i64: 1>, scalar_prefetch = 0 : i64, scratch_operands = 0 : i64, tpu.core_type = #tpu.core_type<tc>, window_params = [{transform_indices = @transform_0, window_bounds = array<i64: 1, 128>}, {transform_indices = @transform_1, window_bounds = array<i64: 1, 128>}, {transform_indices = @transform_2, window_bounds = array<i64: 1, 128>}]} {
    %c0 = arith.constant 0 : index
    %c0_0 = arith.constant 0 : index
    %0 = vector.load %arg1[%c0, %c0_0] : memref<1x128xf32, #tpu.memory_space<vmem>>, vector<1x128xf32>
    %c0_1 = arith.constant 0 : index
    %c0_2 = arith.constant 0 : index
    %1 = vector.load %arg2[%c0_1, %c0_2] : memref<1x128xi8, #tpu.memory_space<vmem>>, vector<1x128xi8>
    %c0_i8 = arith.constant 0 : i8
    %2 = vector.broadcast %c0_i8 : i8 to vector<1x128xi8>
    %3 = arith.cmpi ne, %1, %2 : vector<1x128xi8>
    %4 = arith.negf %0 : vector<1x128xf32>
    %5 = math.exp %4 : vector<1x128xf32>
    %cst = arith.constant 1.000000e+00 : f32
    %6 = vector.broadcast %cst : f32 to vector<1x128xf32>
    %7 = arith.addf %6, %5 : vector<1x128xf32>
    %8 = arith.divf %6, %7 : vector<1x128xf32>
    %cst_3 = arith.constant 1.000000e+00 : f32
    %9 = vector.broadcast %cst_3 : f32 to vector<1x128xf32>
    %10 = arith.subf %9, %8 : vector<1x128xf32>
    %11 = arith.select %3, %8, %10 : vector<1x128xi1>, vector<1x128xf32>
    %cst_4 = arith.constant 1.000000e+00 : f32
    %12 = vector.broadcast %cst_4 : f32 to vector<1x128xf32>
    %13 = arith.subf %12, %11 : vector<1x128xf32>
    %cst_5 = arith.constant 0.000000e+00 : f32
    %14 = vector.broadcast %cst_5 : f32 to vector<1x128xf32>
    %15 = arith.subf %14, %13 : vector<1x128xf32>
    %16 = math.log %11 : vector<1x128xf32>
    %cst_6 = arith.constant -1.000000e+02 : f32
    %17 = vector.broadcast %cst_6 : f32 to vector<1x128xf32>
    %18 = arith.maximumf %16, %17 : vector<1x128xf32>
    %19 = arith.mulf %15, %18 : vector<1x128xf32>
    %c0_i32 = arith.constant 0 : i32
    %20 = arith.cmpi eq, %arg0, %c0_i32 : i32
    %true = arith.constant true
    %21 = arith.xori %20, %true : i1
    %22 = arith.extui %21 : i1 to i32
    %c0_i32_7 = arith.constant 0 : i32
    %23 = arith.cmpi ne, %22, %c0_i32_7 : i32
    scf.if %23 {
      %cst_9 = arith.constant dense<0.000000e+00> : vector<128xf32>
      %26 = vector.multi_reduction <add>, %19, %cst_9 [0] : vector<1x128xf32> to vector<128xf32>
      %27 = vector.shape_cast %26 : vector<128xf32> to vector<1x128xf32>
      %c0_10 = arith.constant 0 : index
      %c0_11 = arith.constant 0 : index
      %28 = vector.load %arg3[%c0_10, %c0_11] : memref<1x128xf32, #tpu.memory_space<vmem>>, vector<1x128xf32>
      tpu.vector_store %arg3[%c0_10, %c0_11], %27 {strides = array<i32>} : memref<1x128xf32, #tpu.memory_space<vmem>>, vector<1x128xf32>,
    } else {
    }
    %24 = arith.extui %20 : i1 to i32
    %c0_i32_8 = arith.constant 0 : i32
    %25 = arith.cmpi ne, %24, %c0_i32_8 : i32
    scf.if %25 {
      %26 = tpu.iota {dimensions = array<i32: 0>} : vector<1x128xi32>
      %27 = tpu.iota {dimensions = array<i32: 1>} : vector<1x128xi32>
      %c128_i32 = arith.constant 128 : i32
      %28 = vector.broadcast %c128_i32 : i32 to vector<1x128xi32>
      %29 = arith.muli %26, %28 : vector<1x128xi32>
      %30 = arith.addi %29, %27 : vector<1x128xi32>
      %c4_i32 = arith.constant 4 : i32
      %31 = vector.broadcast %c4_i32 : i32 to vector<1x128xi32>
      %32 = arith.cmpi slt, %30, %31 : vector<1x128xi32>
      %cst_9 = arith.constant 0.000000e+00 : f32
      %33 = vector.broadcast %cst_9 : f32 to vector<1x128xf32>
      %34 = arith.select %32, %19, %33 : vector<1x128xi1>, vector<1x128xf32>
      %cst_10 = arith.constant dense<0.000000e+00> : vector<128xf32>
      %35 = vector.multi_reduction <add>, %34, %cst_10 [0] : vector<1x128xf32> to vector<128xf32>
      %36 = vector.shape_cast %35 : vector<128xf32> to vector<1x128xf32>
      %c0_11 = arith.constant 0 : index
      %c0_12 = arith.constant 0 : index
      %37 = vector.load %arg3[%c0_11, %c0_12] : memref<1x128xf32, #tpu.memory_space<vmem>>, vector<1x128xf32>
      tpu.vector_store %arg3[%c0_11, %c0_12], %36 {strides = array<i32>} : memref<1x128xf32, #tpu.memory_space<vmem>>, vector<1x128xf32>,
    } else {
    }
    return
  }
  func.func @transform_0(%arg0: i32) -> (i32, i32) {
    %c0_i32 = arith.constant 0 : i32
    %c0_i32_0 = arith.constant 0 : i32
    return %arg0, %c0_i32 : i32, i32
  }
  func.func @transform_1(%arg0: i32) -> (i32, i32) {
    %c0_i32 = arith.constant 0 : i32
    %c0_i32_0 = arith.constant 0 : i32
    return %arg0, %c0_i32 : i32, i32
  }
  func.func @transform_2(%arg0: i32) -> (i32, i32) {
    %c0_i32 = arith.constant 0 : i32
    %c0_i32_0 = arith.constant 0 : i32
    return %arg0, %c0_i32 : i32, i32
  }
}

</mosaic_0001>

<llo_original>
// kernel: tpu_custom_call.1
$region0: #{tpu_custom_call.1}
  #allocation0 [shape = 'u32[]', space=smem, size = 0x4, offset = 0x4, fixed_abs, tag = 'smem constant byte address 0x4 - core index']
  #allocation1 [shape = 'u32[144,128]{1,0:T(1,128)}', space=vmem, size = 0x12000, scoped, tag = 'internal scratch']
  %s0 = inlined_call_operand.hbm [shape: f32[1,128], index: 0, kind: input, shape index: {}]
  %s1 = inlined_call_operand.vmem [shape: s8[1,128], index: 1, kind: input, shape index: {}]
  %s2 = inlined_call_operand.hbm [shape: f32[1,128], index: 2, kind: output, shape index: {}]
  %s3 = sld [smem:[#allocation0]]
  $region30: #{tpu_custom_call.1} parent=0
    _
  %s5 = ssub.s32 1, %s3
  %s6 = scalar_select 0, %s5, %s3
  $region1: #{tpu_custom_call.1} parent=0
    #allocation2 [shape = 'u8[512]{0}', space=vmem, size = 0x400, scoped, tag = 'input window, operand 0, single buffered']
    #allocation3 [shape = 's32[1]{0}', space=sflag, size = 0x4, scoped, tag = 'scoped memory for tpu_custom_call.1']
    #allocation4 [shape = 's32[1]{0}', space=sflag, size = 0x4, scoped, tag = 'scoped memory for tpu_custom_call.1']
    #allocation5 [shape = 'u8[512]{0}', space=vmem, size = 0x400, scoped, tag = 'output window, operand 0, single buffered']
    %7 = vsyncpa [#allocation3], 0
    %8 = vsyncpa [#allocation4], 0
    // Predicated region
    $region2: #{tpu_custom_call.1} parent=1 // pred_check
      _
    $region3: #{tpu_custom_call.1} parent=1 // pred_check_branch
      %10 = sbr.rel (0) target = $region5
    $region4: #{tpu_custom_call.1} parent=1 // pred_region
      %s12 = ssub.s32 16, 16
      %13 = vsyncadd [#allocation3], %s12
      %s15 = sshll.u32 [#allocation2], 4
      %s16 = int_to_ptr.vmem [resolvable:$true] %s15
      %18 = dma.hbm_to_vmem [thread:$0]  %s0, 16, %s16, [#allocation3]
    $region5: #{tpu_custom_call.1} parent=1 // pred_fallthru
      _
    // Predicated region
    $region6: #{tpu_custom_call.1} parent=1 // pred_check
      _
    $region7: #{tpu_custom_call.1} parent=1 // pred_check_branch
      %20 = sbr.rel (0) target = $region9
    $region8: #{tpu_custom_call.1} parent=1 // pred_region
      _
    $region9: #{tpu_custom_call.1} parent=1 // pred_fallthru
      _
    // Predicated region
    $region10: #{tpu_custom_call.1} parent=1 // pred_check
      _
    $region11: #{tpu_custom_call.1} parent=1 // pred_check_branch
      %22 = sbr.rel (0) target = $region13
    $region12: #{tpu_custom_call.1} parent=1 // pred_region
      %23 = dma.done [#allocation3], 16
    $region13: #{tpu_custom_call.1} parent=1 // pred_fallthru
      _
    %v26 = vld [vmem:[#allocation2] sm:$0x1]
    %v27 = vld [vmem:[%s1] sm:$0x1]
    %vm28 = vnez %v27
    %v29 = vxor.u32 %v26, 2147483648
    %v30 = vmul.f32 %v29, 1.442695
    %v31 = vpow.pop %v30
    %v32 = vadd.f32 %v31, 1.0
    %v33 = vrcp.pop %v32
    %v34 = vmul.f32 1.0, %v33
    %v35 = vsub.f32 1.0, %v34
    %v36 = vsel %vm28, 16843009, 0
    %v37 = vunpack.c.0.s8 %v36
    %vm38 = vcmp.ne.s32.totalorder %v37, 0
    %v39 = vsel %vm38, %v34, %v35
    %v40 = vsub.f32 1.0, %v39
    %v41 = vsub.f32 0.0, %v40
    %v42 = vlog2.pop %v39
    %v43 = vmul.f32 %v42, 0.6931472
    %v44 = vmax.f32 %v43, -100.0
    %v45 = vmul.f32 %v41, %v44
    %p46 = scmp.eq.s32.totalorder 0, 0
    %p47 = scmp.ne.s32.totalorder 0, 0
    // Predicated region
    $region14: #{tpu_custom_call.1} parent=1 // pred_check
      %p48 = pneg %p47
    $region15: #{tpu_custom_call.1} parent=1 // pred_check_branch
      %50 = sbr.rel (%p48) target = $region17
    $region16: #{tpu_custom_call.1} parent=1 // pred_region
      %v51 = vadd.f32 %v45, 0.0
      %52 = vst [vmem:[#allocation5] sm:$0x1] %v51
    $region17: #{tpu_custom_call.1} parent=1 // pred_fallthru
      _
    // Predicated region
    $region18: #{tpu_custom_call.1} parent=1 // pred_check
      %p53 = pneg %p46
    $region19: #{tpu_custom_call.1} parent=1 // pred_check_branch
      %55 = sbr.rel (%p53) target = $region21
    $region20: #{tpu_custom_call.1} parent=1 // pred_region
      %v56 = vlaneseq
      %v57 = vshrl.u32 %v56, 7
      %v58 = vlaneseq
      %v59 = vand.u32 %v58, 127
      %v60 = vmul.u32 %v57, 128
      %v61 = vadd.s32 %v60, %v59
      %vm62 = vcmp.lt.s32.totalorder %v61, 4
      %v63 = vsel %vm62, %v45, 0.0
      %v64 = vadd.f32 %v63, 0.0
      %65 = vst [vmem:[#allocation5] sm:$0x1] %v64
    $region21: #{tpu_custom_call.1} parent=1 // pred_fallthru
      _
    // Predicated region
    $region22: #{tpu_custom_call.1} parent=1 // pred_check
      _
    $region23: #{tpu_custom_call.1} parent=1 // pred_check_branch
      %67 = sbr.rel (0) target = $region25
    $region24: #{tpu_custom_call.1} parent=1 // pred_region
      %s69 = ssub.s32 16, 16
      %70 = vsyncadd [#allocation4], %s69
      %s72 = sshll.u32 [#allocation5], 4
      %s73 = int_to_ptr.vmem [resolvable:$true] %s72
      %75 = dma.vmem_to_hbm [thread:$0]  %s73, 16, %s2, [#allocation4]
    $region25: #{tpu_custom_call.1} parent=1 // pred_fallthru
      _
    // Predicated region
    $region26: #{tpu_custom_call.1} parent=1 // pred_check
      _
    $region27: #{tpu_custom_call.1} parent=1 // pred_check_branch
      %77 = sbr.rel (0) target = $region29
    $region28: #{tpu_custom_call.1} parent=1 // pred_region
      %78 = dma.done [#allocation4], 16
    $region29: #{tpu_custom_call.1} parent=1 // pred_fallthru
      _
    %79 = vsyncpa [#allocation3], 1
    %80 = vsyncpa [#allocation4], 1

</llo_original>
